<compile_context>
chip_gen: v5e
topology: v5e:2x2
jax: 0.10.0
libtpu: 0.0.40
codegen_flags: <defaults>
</compile_context>

<pallas_src>
import jax
import jax.numpy as jnp
import numpy as np
from jax.experimental import pallas as pl
from jax.experimental.pallas import tpu as pltpu

HIDDEN_DIM = 32
NUM_WEAPONS = 2
NUM_TARGETS = 3
NUM_ACTIONS = NUM_WEAPONS * NUM_TARGETS + 1  # = 7

_AH = NUM_ACTIONS * HIDDEN_DIM   # 224 activation columns per B*T row
_SLAB = 256                      # activations (224) + mask (7) + zero pad (25)


# ---------------------------------------------------------------------------
# Fused kernel: 3-layer MLP (block-diag weights over the A action slots,
# bf16 operands / f32 accumulation) followed by masked softmax over A actions.
# ---------------------------------------------------------------------------
def _fused_policy_kernel(x_ref, w1_ref, b1_ref, w2_ref, b2_ref,
                         w3_ref, b3_ref, o_ref):
    x = x_ref[...]                                                   # (tbt, 256) bf16
    # bf16 MXU operands, f32 accumulation; bias + ReLU in f32.
    h1 = jnp.dot(x, w1_ref[...], preferred_element_type=jnp.float32) + b1_ref[...]
    h1 = jnp.maximum(h1, 0.0).astype(jnp.bfloat16)                   # (tbt, 448)
    h2 = jnp.dot(h1, w2_ref[...], preferred_element_type=jnp.float32) + b2_ref[...]
    h2 = jnp.maximum(h2, 0.0).astype(jnp.bfloat16)                   # (tbt, 224)
    # (tbt, 224) @ (224, A) -> logits already in (tbt, A) layout.
    logits = jnp.dot(h2, w3_ref[...], preferred_element_type=jnp.float32) + b3_ref[...]

    # Mask is folded into the activation slab at columns [224, 231).
    mask7 = x[:, _AH:_AH + NUM_ACTIONS]                              # (tbt, A) bf16 {0,1}
    masked = jnp.where(mask7 > 0, logits, -jnp.inf)                  # (tbt, A) f32
    m = jnp.max(masked, axis=-1, keepdims=True)
    e = jnp.exp(masked - m)
    s = jnp.sum(e, axis=-1, keepdims=True)
    o_ref[...] = e * pl.reciprocal(s, approx=True)
    # TODO(synk): if profiling shows vst.msk / output-DMA stalls on the (tbt,7)
    # store path (most likely on v5e), pad w3b/b3b to 128 output columns and
    # write a lane-dense output instead.


def fused_policy(slab, w1b, b1b, w2b, b2b, w3b, b3b, *, tbt):
    BTp = slab.shape[0]
    A = NUM_ACTIONS
    cost = pl.CostEstimate(
        flops=2 * BTp * (_SLAB * w1b.shape[1]
                         + w2b.shape[0] * w2b.shape[1]
                         + w3b.shape[0] * A),
        transcendentals=BTp * A,
        bytes_accessed=(BTp * _SLAB * 2 + BTp * A * 4
                        + w1b.size * 2 + w2b.size * 2 + w3b.size * 2
                        + (b1b.size + b2b.size + b3b.size) * 4),
    )
    return pl.pallas_call(
        _fused_policy_kernel,
        out_shape=jax.ShapeDtypeStruct((BTp, A), jnp.float32),
        grid_spec=pltpu.PrefetchScalarGridSpec(
            num_scalar_prefetch=0,
            grid=(BTp // tbt,),
            in_specs=[
                pl.BlockSpec((tbt, _SLAB), lambda i: (i, 0)),   # activations + mask
                pl.BlockSpec(w1b.shape, lambda i: (0, 0)),      # resident weights
                pl.BlockSpec(b1b.shape, lambda i: (0, 0)),
                pl.BlockSpec(w2b.shape, lambda i: (0, 0)),
                pl.BlockSpec(b2b.shape, lambda i: (0, 0)),
                pl.BlockSpec(w3b.shape, lambda i: (0, 0)),
                pl.BlockSpec(b3b.shape, lambda i: (0, 0)),
            ],
            out_specs=pl.BlockSpec((tbt, A), lambda i: (i, 0)),
        ),
        compiler_params=pltpu.CompilerParams(
            dimension_semantics=("parallel",),
            vmem_limit_bytes=32 << 20),
        cost_estimate=cost,
    )(slab, w1b, b1b, w2b, b2b, w3b, b3b)


# ---------------------------------------------------------------------------
# Parameters & one-time weight preparation (block-diag expansion + bf16 cast)
# ---------------------------------------------------------------------------
def init_params(key):
    H = HIDDEN_DIM
    ks = jax.random.split(key, 6)

    def linear(kw, kb, fan_in, fan_out):
        bound = 1.0 / np.sqrt(fan_in)
        w = jax.random.uniform(kw, (fan_in, fan_out), jnp.float32, -bound, bound)
        b = jax.random.uniform(kb, (1, fan_out), jnp.float32, -bound, bound)
        return w, b

    w1, b1 = linear(ks[0], ks[1], H, 2 * H)
    w2, b2 = linear(ks[2], ks[3], 2 * H, H)
    w3, b3 = linear(ks[4], ks[5], H, 1)
    return dict(w1=w1, b1=b1, w2=w2, b2=b2, w3=w3, b3=b3)


def prepare_policy_params(params):
    """Hoisted, one-time block-diag expansion of the shared per-action MLP."""
    A, H = NUM_ACTIONS, HIDDEN_DIM
    eye = jnp.eye(A, dtype=jnp.float32)
    w1b = jnp.kron(eye, params["w1"])                                  # (224, 448)
    # 32 extra zero rows so the mask / pad columns of the slab never contribute.
    w1b = jnp.concatenate(
        [w1b, jnp.zeros((_SLAB - _AH, w1b.shape[1]), jnp.float32)], axis=0)  # (256, 448)
    w2b = jnp.kron(eye, params["w2"])                                  # (448, 224)
    w3b = jnp.kron(eye, params["w3"])                                  # (224, 7)
    return dict(
        w1b=w1b.astype(jnp.bfloat16),
        w2b=w2b.astype(jnp.bfloat16),
        w3b=w3b.astype(jnp.bfloat16),
        b1b=jnp.tile(params["b1"], (1, A)),                            # (1, 448) f32
        b2b=jnp.tile(params["b2"], (1, A)),                            # (1, 224) f32
        b3b=jnp.tile(params["b3"], (1, A)),                            # (1, 7)   f32
    )


# ---------------------------------------------------------------------------
# Module forward
# ---------------------------------------------------------------------------
def lstm_forward(prepared, state, mask, *, tbt=1024):
    """Returns (policy_nn, shared_result) like the PyTorch module."""
    B, T, A, H = state.shape
    BT = B * T

    x2 = state.reshape(BT, A * H).astype(jnp.float32)       # contiguous -> free reshape
    mask2 = mask.reshape(BT, A).astype(jnp.float32)
    # Fold mask into the activation slab: [x (224) | mask (7) | zeros (25)] -> 256 lanes.
    slab = jnp.concatenate(
        [x2, mask2, jnp.zeros((BT, _SLAB - _AH - A), jnp.float32)],
        axis=1).astype(jnp.bfloat16)

    # Tile the B*T axis: multiple of 16 (bf16 sublane packing), large enough to
    # amortize per-step cost, but >=2 grid steps when possible (v7x megacore).
    tbt = max(16, min(tbt, -(-BT // 2)))
    tbt = ((tbt + 15) // 16) * 16
    BTp = ((BT + tbt - 1) // tbt) * tbt
    if BTp != BT:
        slab = jnp.pad(slab, ((0, BTp - BT), (0, 0)))
        # Give padded rows one valid action so their (discarded) softmax is finite.
        slab = slab.at[BT:, _AH].set(jnp.bfloat16(1.0))

    probs = fused_policy(slab, prepared["w1b"], prepared["b1b"],
                         prepared["w2b"], prepared["b2b"],
                         prepared["w3b"], prepared["b3b"], tbt=tbt)
    policy_nn = probs[:BT].reshape(B, T, A)
    return policy_nn, state
    # TODO(synk): self.gelu / self.Leaky are constructed but unused in forward; omitted.


def _reference_forward(params, state, mask):
    """Pure-JAX f32 reference of the PyTorch forward, for validation."""
    h = jnp.maximum(state @ params["w1"] + params["b1"][0], 0.0)
    h = jnp.maximum(h @ params["w2"] + params["b2"][0], 0.0)
    logits = (h @ params["w3"] + params["b3"][0])[..., 0]
    logits = jnp.where(mask.astype(bool), logits, -jnp.inf)
    return jax.nn.softmax(logits, axis=-1), state


if __name__ == "__main__":
    B, T = 2, 4
    A, H = NUM_ACTIONS, HIDDEN_DIM

    key = jax.random.PRNGKey(0)
    k_state, k_mask, k_param = jax.random.split(key, 3)

    state = jax.random.normal(k_state, (B, T, A, H), jnp.float32)
    mask = (jax.random.uniform(k_mask, (B, T, A)) > 0.3).astype(jnp.int32)
    mask = mask.at[..., 0].set(1)  # guarantee at least one valid action per row

    params = init_params(k_param)
    prepared = prepare_policy_params(params)   # one-time block-diag + bf16 cast

    fwd = jax.jit(lstm_forward)
    policy, shared = fwd(prepared, state, mask)
    policy = jax.block_until_ready(policy)
    shared = jax.block_until_ready(shared)

    ref_policy, ref_shared = _reference_forward(params, state, mask)
    # bf16 MXU operands (f32 accumulation) -> relaxed tolerance vs. f32 reference.
    np.testing.assert_allclose(np.asarray(policy), np.asarray(ref_policy),
                               rtol=2e-2, atol=2e-2)
    np.testing.assert_allclose(np.asarray(shared), np.asarray(ref_shared))

    print("KERNEL_OK")
</pallas_src>

<mosaic_0001>
module attributes {stable_mosaic.version = 11 : i64} {
  func.func @_fused_policy_kernel(%arg0: i32, %arg1: memref<16x256xbf16, #tpu.memory_space<vmem>>, %arg2: memref<256x448xbf16, #tpu.memory_space<vmem>>, %arg3: memref<1x448xf32, #tpu.memory_space<vmem>>, %arg4: memref<448x224xbf16, #tpu.memory_space<vmem>>, %arg5: memref<1x224xf32, #tpu.memory_space<vmem>>, %arg6: memref<224x7xbf16, #tpu.memory_space<vmem>>, %arg7: memref<1x7xf32, #tpu.memory_space<vmem>>, %arg8: memref<16x7xf32, #tpu.memory_space<vmem>>) attributes {dimension_semantics = [#tpu.dimension_semantics<parallel>], iteration_bounds = array<i64: 1>, scalar_prefetch = 0 : i64, scratch_operands = 0 : i64, tpu.core_type = #tpu.core_type<tc>, window_params = [{transform_indices = @transform_0, window_bounds = array<i64: 16, 256>}, {pipeline_mode = #tpu.pipeline_mode<synchronous>, transform_indices = @transform_1, window_bounds = array<i64: 256, 448>}, {pipeline_mode = #tpu.pipeline_mode<synchronous>, transform_indices = @transform_2, window_bounds = array<i64: 1, 448>}, {pipeline_mode = #tpu.pipeline_mode<synchronous>, transform_indices = @transform_3, window_bounds = array<i64: 448, 224>}, {pipeline_mode = #tpu.pipeline_mode<synchronous>, transform_indices = @transform_4, window_bounds = array<i64: 1, 224>}, {pipeline_mode = #tpu.pipeline_mode<synchronous>, transform_indices = @transform_5, window_bounds = array<i64: 224, 7>}, {pipeline_mode = #tpu.pipeline_mode<synchronous>, transform_indices = @transform_6, window_bounds = array<i64: 1, 7>}, {transform_indices = @transform_7, window_bounds = array<i64: 16, 7>}]} {
    %c0 = arith.constant 0 : index
    %c0_0 = arith.constant 0 : index
    %0 = vector.load %arg1[%c0, %c0_0] : memref<16x256xbf16, #tpu.memory_space<vmem>>, vector<16x256xbf16>
    %c0_1 = arith.constant 0 : index
    %c0_2 = arith.constant 0 : index
    %1 = vector.load %arg2[%c0_1, %c0_2] : memref<256x448xbf16, #tpu.memory_space<vmem>>, vector<256x448xbf16>
    %cst = arith.constant dense<0.000000e+00> : vector<16x448xf32>
    %2 = tpu.matmul %0, %1, %cst {dimension_numbers = #tpu.dot_dimension_numbers<[1], [0], [0], [1], [0, 0, 1, 1], [], []>} : vector<16x256xbf16>, vector<256x448xbf16>, vector<16x448xf32> -> vector<16x448xf32>
    %c0_3 = arith.constant 0 : index
    %c0_4 = arith.constant 0 : index
    %3 = vector.load %arg3[%c0_3, %c0_4] : memref<1x448xf32, #tpu.memory_space<vmem>>, vector<1x448xf32>
    %4 = vector.broadcast %3 : vector<1x448xf32> to vector<16x448xf32>
    %5 = arith.addf %2, %4 : vector<16x448xf32>
    %cst_5 = arith.constant 0.000000e+00 : f32
    %6 = vector.broadcast %cst_5 : f32 to vector<16x448xf32>
    %7 = arith.maximumf %5, %6 : vector<16x448xf32>
    %8 = arith.truncf %7 : vector<16x448xf32> to vector<16x448xbf16>
    %c0_6 = arith.constant 0 : index
    %c0_7 = arith.constant 0 : index
    %9 = vector.load %arg4[%c0_6, %c0_7] : memref<448x224xbf16, #tpu.memory_space<vmem>>, vector<448x224xbf16>
    %cst_8 = arith.constant dense<0.000000e+00> : vector<16x224xf32>
    %10 = tpu.matmul %8, %9, %cst_8 {dimension_numbers = #tpu.dot_dimension_numbers<[1], [0], [0], [1], [0, 0, 1, 1], [], []>} : vector<16x448xbf16>, vector<448x224xbf16>, vector<16x224xf32> -> vector<16x224xf32>
    %c0_9 = arith.constant 0 : index
    %c0_10 = arith.constant 0 : index
    %11 = vector.load %arg5[%c0_9, %c0_10] : memref<1x224xf32, #tpu.memory_space<vmem>>, vector<1x224xf32>
    %12 = vector.broadcast %11 : vector<1x224xf32> to vector<16x224xf32>
    %13 = arith.addf %10, %12 : vector<16x224xf32>
    %cst_11 = arith.constant 0.000000e+00 : f32
    %14 = vector.broadcast %cst_11 : f32 to vector<16x224xf32>
    %15 = arith.maximumf %13, %14 : vector<16x224xf32>
    %16 = arith.truncf %15 : vector<16x224xf32> to vector<16x224xbf16>
    %c0_12 = arith.constant 0 : index
    %c0_13 = arith.constant 0 : index
    %17 = vector.load %arg6[%c0_12, %c0_13] : memref<224x7xbf16, #tpu.memory_space<vmem>>, vector<224x7xbf16>
    %cst_14 = arith.constant dense<0.000000e+00> : vector<16x7xf32>
    %18 = tpu.matmul %16, %17, %cst_14 {dimension_numbers = #tpu.dot_dimension_numbers<[1], [0], [0], [1], [0, 0, 1, 1], [], []>} : vector<16x224xbf16>, vector<224x7xbf16>, vector<16x7xf32> -> vector<16x7xf32>
    %c0_15 = arith.constant 0 : index
    %c0_16 = arith.constant 0 : index
    %19 = vector.load %arg7[%c0_15, %c0_16] : memref<1x7xf32, #tpu.memory_space<vmem>>, vector<1x7xf32>
    %20 = vector.broadcast %19 : vector<1x7xf32> to vector<16x7xf32>
    %21 = arith.addf %18, %20 : vector<16x7xf32>
    %22 = vector.extract_strided_slice %0 {offsets = [0, 224], sizes = [16, 7], strides = [1, 1]} : vector<16x256xbf16> to vector<16x7xbf16>
    %cst_17 = arith.constant 0.000000e+00 : bf16
    %23 = vector.broadcast %cst_17 : bf16 to vector<16x7xbf16>
    %24 = arith.cmpf ogt, %22, %23 : vector<16x7xbf16>
    %cst_18 = arith.constant 0xFF800000 : f32
    %25 = vector.broadcast %cst_18 : f32 to vector<16x7xf32>
    %26 = arith.select %24, %21, %25 : vector<16x7xi1>, vector<16x7xf32>
    %cst_19 = arith.constant dense<0xFF800000> : vector<16xf32>
    %27 = vector.multi_reduction <maximumf>, %26, %cst_19 [1] : vector<16x7xf32> to vector<16xf32>
    %28 = vector.shape_cast %27 : vector<16xf32> to vector<16x1xf32>
    %29 = vector.broadcast %28 : vector<16x1xf32> to vector<16x7xf32>
    %30 = arith.subf %26, %29 : vector<16x7xf32>
    %31 = math.exp %30 : vector<16x7xf32>
    %cst_20 = arith.constant dense<0.000000e+00> : vector<16xf32>
    %32 = vector.multi_reduction <add>, %31, %cst_20 [1] : vector<16x7xf32> to vector<16xf32>
    %33 = vector.shape_cast %32 : vector<16xf32> to vector<16x1xf32>
    %34 = tpu.reciprocal %33 {approx = true} : vector<16x1xf32> -> vector<16x1xf32>
    %35 = vector.broadcast %34 : vector<16x1xf32> to vector<16x7xf32>
    %36 = arith.mulf %31, %35 : vector<16x7xf32>
    %c0_21 = arith.constant 0 : index
    %c0_22 = arith.constant 0 : index
    %37 = vector.load %arg8[%c0_21, %c0_22] : memref<16x7xf32, #tpu.memory_space<vmem>>, vector<16x7xf32>
    tpu.vector_store %arg8[%c0_21, %c0_22], %36 {strides = array<i32>} : memref<16x7xf32, #tpu.memory_space<vmem>>, vector<16x7xf32>,
    return
  }
  func.func @transform_0(%arg0: i32) -> (i32, i32) {
    %c0_i32 = arith.constant 0 : i32
    %c0_i32_0 = arith.constant 0 : i32
    return %arg0, %c0_i32 : i32, i32
  }
  func.func @transform_1(%arg0: i32) -> (i32, i32) {
    %c0_i32 = arith.constant 0 : i32
    %c0_i32_0 = arith.constant 0 : i32
    %c0_i32_1 = arith.constant 0 : i32
    return %c0_i32, %c0_i32_0 : i32, i32
  }
  func.func @transform_2(%arg0: i32) -> (i32, i32) {
    %c0_i32 = arith.constant 0 : i32
    %c0_i32_0 = arith.constant 0 : i32
    %c0_i32_1 = arith.constant 0 : i32
    return %c0_i32, %c0_i32_0 : i32, i32
  }
  func.func @transform_3(%arg0: i32) -> (i32, i32) {
    %c0_i32 = arith.constant 0 : i32
    %c0_i32_0 = arith.constant 0 : i32
    %c0_i32_1 = arith.constant 0 : i32
    return %c0_i32, %c0_i32_0 : i32, i32
  }
  func.func @transform_4(%arg0: i32) -> (i32, i32) {
    %c0_i32 = arith.constant 0 : i32
    %c0_i32_0 = arith.constant 0 : i32
    %c0_i32_1 = arith.constant 0 : i32
    return %c0_i32, %c0_i32_0 : i32, i32
  }
  func.func @transform_5(%arg0: i32) -> (i32, i32) {
    %c0_i32 = arith.constant 0 : i32
    %c0_i32_0 = arith.constant 0 : i32
    %c0_i32_1 = arith.constant 0 : i32
    return %c0_i32, %c0_i32_0 : i32, i32
  }
  func.func @transform_6(%arg0: i32) -> (i32, i32) {
    %c0_i32 = arith.constant 0 : i32
    %c0_i32_0 = arith.constant 0 : i32
    %c0_i32_1 = arith.constant 0 : i32
    return %c0_i32, %c0_i32_0 : i32, i32
  }
  func.func @transform_7(%arg0: i32) -> (i32, i32) {
    %c0_i32 = arith.constant 0 : i32
    %c0_i32_0 = arith.constant 0 : i32
    return %arg0, %c0_i32 : i32, i32
  }
}

</mosaic_0001>

<llo_original>
// kernel: lstm_forward.1
$region0: #{lstm_forward.1}
  #allocation0 [shape = 'u32[]', space=smem, size = 0x4, offset = 0x4, fixed_abs, tag = 'smem constant byte address 0x4 - core index']
  #allocation1 [shape = 'u32[72,128]{1,0:T(1,128)}', space=vmem, size = 0x9000, scoped, tag = 'internal scratch']
  %s0 = inlined_call_operand.vmem [shape: bf16[16,256], index: 0, kind: input, shape index: {}]
  %s1 = inlined_call_operand.vmem [shape: bf16[256,448], index: 1, kind: input, shape index: {}]
  %s2 = inlined_call_operand.vmem [shape: f32[1,448], index: 2, kind: input, shape index: {}]
  %s3 = inlined_call_operand.vmem [shape: bf16[448,224], index: 3, kind: input, shape index: {}]
  %s4 = inlined_call_operand.vmem [shape: f32[1,224], index: 4, kind: input, shape index: {}]
  %s5 = inlined_call_operand.vmem [shape: bf16[224,7], index: 5, kind: input, shape index: {}]
  %s6 = inlined_call_operand.vmem [shape: f32[1,7], index: 6, kind: input, shape index: {}]
  %s7 = inlined_call_operand.vmem [shape: f32[16,7], index: 7, kind: output, shape index: {}]
  %s8 = sld [smem:[#allocation0]]
  $region38: #{lstm_forward.1} parent=0
    _
  %s10 = ssub.s32 1, %s8
  %s11 = scalar_select 0, %s10, %s8
  // Predicated region
  $region2: #{lstm_forward.1} parent=0 // pred_check
    _
  $region3: #{lstm_forward.1} parent=0 // pred_check_branch
    %13 = sbr.rel (0) target = $region5
  $region4: #{lstm_forward.1} parent=0 // pred_region
    _
  $region5: #{lstm_forward.1} parent=0 // pred_fallthru
    _
  // Predicated region
  $region6: #{lstm_forward.1} parent=0 // pred_check
    _
  $region7: #{lstm_forward.1} parent=0 // pred_check_branch
    %15 = sbr.rel (0) target = $region9
  $region8: #{lstm_forward.1} parent=0 // pred_region
    _
  $region9: #{lstm_forward.1} parent=0 // pred_fallthru
    _
  // Predicated region
  $region10: #{lstm_forward.1} parent=0 // pred_check
    _
  $region11: #{lstm_forward.1} parent=0 // pred_check_branch
    %17 = sbr.rel (0) target = $region13
  $region12: #{lstm_forward.1} parent=0 // pred_region
    _
  $region13: #{lstm_forward.1} parent=0 // pred_fallthru
    _
  // Predicated region
  $region14: #{lstm_forward.1} parent=0 // pred_check
    _
  $region15: #{lstm_forward.1} parent=0 // pred_check_branch
    %19 = sbr.rel (0) target = $region17
  $region16: #{lstm_forward.1} parent=0 // pred_region
    _
  $region17: #{lstm_forward.1} parent=0 // pred_fallthru
    _
  // Predicated region
  $region18: #{lstm_forward.1} parent=0 // pred_check
    _
  $region19: #{lstm_forward.1} parent=0 // pred_check_branch
    %21 = sbr.rel (0) target = $region21
  $region20: #{lstm_forward.1} parent=0 // pred_region
    _
  $region21: #{lstm_forward.1} parent=0 // pred_fallthru
    _
  // Predicated region
  $region22: #{lstm_forward.1} parent=0 // pred_check
    _
  $region23: #{lstm_forward.1} parent=0 // pred_check_branch
    %23 = sbr.rel (0) target = $region25
  $region24: #{lstm_forward.1} parent=0 // pred_region
    _
  $region25: #{lstm_forward.1} parent=0 // pred_fallthru
    _
  // Predicated region
  $region26: #{lstm_forward.1} parent=0 // pred_check
    _
  $region27: #{lstm_forward.1} parent=0 // pred_check_branch
    %25 = sbr.rel (0) target = $region29
  $region28: #{lstm_forward.1} parent=0 // pred_region
    _
  $region29: #{lstm_forward.1} parent=0 // pred_fallthru
    _
  %v27 = vld [vmem:[%s0] sm:$0xff]
  %v28 = vld [vmem:[%s0 + $0x8] sm:$0xff]
  %v29 = vld [vmem:[%s1] sm:$0xff]
  %v30 = vld [vmem:[%s1 + $0x8] sm:$0xff]
  %v31 = vld [vmem:[%s1 + $0x10] sm:$0xff]
  %v32 = vld [vmem:[%s1 + $0x18] sm:$0xff]
  %v33 = vld [vmem:[%s1 + $0x20] sm:$0xff]
  %v34 = vld [vmem:[%s1 + $0x28] sm:$0xff]
  %v35 = vld [vmem:[%s1 + $0x30] sm:$0xff]
  %v36 = vld [vmem:[%s1 + $0x38] sm:$0xff]
  %v37 = vld [vmem:[%s1 + $0x40] sm:$0xff]
  %v38 = vld [vmem:[%s1 + $0x48] sm:$0xff]
  %v39 = vld [vmem:[%s1 + $0x50] sm:$0xff]
  %v40 = vld [vmem:[%s1 + $0x58] sm:$0xff]
  %v41 = vld [vmem:[%s1 + $0x60] sm:$0xff]
  %v42 = vld [vmem:[%s1 + $0x68] sm:$0xff]
  %v43 = vld [vmem:[%s1 + $0x70] sm:$0xff]
  %v44 = vld [vmem:[%s1 + $0x78] sm:$0xff]
  %v45 = vld [vmem:[%s1 + $0x80] sm:$0xff]
  %v46 = vld [vmem:[%s1 + $0x88] sm:$0xff]
  %v47 = vld [vmem:[%s1 + $0x90] sm:$0xff]
  %v48 = vld [vmem:[%s1 + $0x98] sm:$0xff]
  %v49 = vld [vmem:[%s1 + $0xa0] sm:$0xff]
  %v50 = vld [vmem:[%s1 + $0xa8] sm:$0xff]
  %v51 = vld [vmem:[%s1 + $0xb0] sm:$0xff]
  %v52 = vld [vmem:[%s1 + $0xb8] sm:$0xff]
  %v53 = vld [vmem:[%s1 + $0xc0] sm:$0xff]
  %v54 = vld [vmem:[%s1 + $0xc8] sm:$0xff]
  %v55 = vld [vmem:[%s1 + $0xd0] sm:$0xff]
  %v56 = vld [vmem:[%s1 + $0xd8] sm:$0xff]
  %v57 = vld [vmem:[%s1 + $0xe0] sm:$0xff]
  %v58 = vld [vmem:[%s1 + $0xe8] sm:$0xff]
  %v59 = vld [vmem:[%s1 + $0xf0] sm:$0xff]
  %v60 = vld [vmem:[%s1 + $0xf8] sm:$0xff]
  %v61 = vld [vmem:[%s1 + $0x100] sm:$0xff]
  %v62 = vld [vmem:[%s1 + $0x108] sm:$0xff]
  %v63 = vld [vmem:[%s1 + $0x110] sm:$0xff]
  %v64 = vld [vmem:[%s1 + $0x118] sm:$0xff]
  %v65 = vld [vmem:[%s1 + $0x120] sm:$0xff]
  %v66 = vld [vmem:[%s1 + $0x128] sm:$0xff]
  %v67 = vld [vmem:[%s1 + $0x130] sm:$0xff]
  %v68 = vld [vmem:[%s1 + $0x138] sm:$0xff]
  %v69 = vld [vmem:[%s1 + $0x140] sm:$0xff]
  %v70 = vld [vmem:[%s1 + $0x148] sm:$0xff]
  %v71 = vld [vmem:[%s1 + $0x150] sm:$0xff]
  %v72 = vld [vmem:[%s1 + $0x158] sm:$0xff]
  %v73 = vld [vmem:[%s1 + $0x160] sm:$0xff]
  %v74 = vld [vmem:[%s1 + $0x168] sm:$0xff]
  %v75 = vld [vmem:[%s1 + $0x170] sm:$0xff]
  %v76 = vld [vmem:[%s1 + $0x178] sm:$0xff]
  %v77 = vld [vmem:[%s1 + $0x180] sm:$0xff]
  %v78 = vld [vmem:[%s1 + $0x188] sm:$0xff]
  %v79 = vld [vmem:[%s1 + $0x190] sm:$0xff]
  %v80 = vld [vmem:[%s1 + $0x198] sm:$0xff]
  %v81 = vld [vmem:[%s1 + $0x1a0] sm:$0xff]
  %v82 = vld [vmem:[%s1 + $0x1a8] sm:$0xff]
  %v83 = vld [vmem:[%s1 + $0x1b0] sm:$0xff]
  %v84 = vld [vmem:[%s1 + $0x1b8] sm:$0xff]
  %v85 = vld [vmem:[%s1 + $0x1c0] sm:$0xff]
  %v86 = vld [vmem:[%s1 + $0x1c8] sm:$0xff]
  %v87 = vld [vmem:[%s1 + $0x1d0] sm:$0xff]
  %v88 = vld [vmem:[%s1 + $0x1d8] sm:$0xff]
  %v89 = vld [vmem:[%s1 + $0x1e0] sm:$0xff]
  %v90 = vld [vmem:[%s1 + $0x1e8] sm:$0xff]
  %v91 = vld [vmem:[%s1 + $0x1f0] sm:$0xff]
  %v92 = vld [vmem:[%s1 + $0x1f8] sm:$0xff]
  %v93 = vld [vmem:[%s2] sm:$0xf]
  %v95 = vperm.slane %v93, 0
  %v96 = vperm.slane %v93, 1
  %v97 = vperm.slane %v93, 2
  %v98 = vperm.slane %v93, 3
  %v105 = vunpack.c.l.b16 %v27
  %v106 = vunpack.c.h.b16 %v27
  %v107 = vunpack.c.l.b16 %v28
  %v108 = vunpack.c.h.b16 %v28
  %v109 = vpack.c.b16 %v107, %v105
  %v110 = vpack.c.b16 %v108, %v106
  %v177 = vunpack.c.l.b16 %v29
  %v178 = vunpack.c.h.b16 %v29
  %v179 = vunpack.c.l.b16 %v30
  %v180 = vunpack.c.h.b16 %v30
  %v181 = vunpack.c.l.b16 %v31
  %v182 = vunpack.c.h.b16 %v31
  %v183 = vunpack.c.l.b16 %v32
  %v184 = vunpack.c.h.b16 %v32
  %v185 = vunpack.c.l.b16 %v33
  %v186 = vunpack.c.h.b16 %v33
  %v187 = vunpack.c.l.b16 %v34
  %v188 = vunpack.c.h.b16 %v34
  %v189 = vunpack.c.l.b16 %v35
  %v190 = vunpack.c.h.b16 %v35
  %v191 = vunpack.c.l.b16 %v36
  %v192 = vunpack.c.h.b16 %v36
  %v193 = vunpack.c.l.b16 %v37
  %v194 = vunpack.c.h.b16 %v37
  %v195 = vunpack.c.l.b16 %v38
  %v196 = vunpack.c.h.b16 %v38
  %v197 = vunpack.c.l.b16 %v39
  %v198 = vunpack.c.h.b16 %v39
  %v199 = vunpack.c.l.b16 %v40
  %v200 = vunpack.c.h.b16 %v40
  %v201 = vunpack.c.l.b16 %v41
  %v202 = vunpack.c.h.b16 %v41
  %v203 = vunpack.c.l.b16 %v42
  %v204 = vunpack.c.h.b16 %v42
  %v205 = vunpack.c.l.b16 %v43
  %v206 = vunpack.c.h.b16 %v43
  %v207 = vunpack.c.l.b16 %v44
  %v208 = vunpack.c.h.b16 %v44
  %v209 = vunpack.c.l.b16 %v45
  %v210 = vunpack.c.h.b16 %v45
  %v211 = vunpack.c.l.b16 %v46
  %v212 = vunpack.c.h.b16 %v46
  %v213 = vunpack.c.l.b16 %v47
  %v214 = vunpack.c.h.b16 %v47
  %v215 = vunpack.c.l.b16 %v48
  %v216 = vunpack.c.h.b16 %v48
  %v217 = vunpack.c.l.b16 %v49
  %v218 = vunpack.c.h.b16 %v49
  %v219 = vunpack.c.l.b16 %v50
  %v220 = vunpack.c.h.b16 %v50
  %v221 = vunpack.c.l.b16 %v51
  %v222 = vunpack.c.h.b16 %v51
  %v223 = vunpack.c.l.b16 %v52
  %v224 = vunpack.c.h.b16 %v52
  %v225 = vunpack.c.l.b16 %v53
  %v226 = vunpack.c.h.b16 %v53
  %v227 = vunpack.c.l.b16 %v54
  %v228 = vunpack.c.h.b16 %v54
  %v229 = vunpack.c.l.b16 %v55
  %v230 = vunpack.c.h.b16 %v55
  %v231 = vunpack.c.l.b16 %v56
  %v232 = vunpack.c.h.b16 %v56
  %v233 = vunpack.c.l.b16 %v57
  %v234 = vunpack.c.h.b16 %v57
  %v235 = vunpack.c.l.b16 %v58
  %v236 = vunpack.c.h.b16 %v58
  %v237 = vunpack.c.l.b16 %v59
  %v238 = vunpack.c.h.b16 %v59
  %v239 = vunpack.c.l.b16 %v60
  %v240 = vunpack.c.h.b16 %v60
  %v241 = vunpack.c.l.b16 %v61
  %v242 = vunpack.c.h.b16 %v61
  %v243 = vunpack.c.l.b16 %v62
  %v244 = vunpack.c.h.b16 %v62
  %v245 = vunpack.c.l.b16 %v63
  %v246 = vunpack.c.h.b16 %v63
  %v247 = vunpack.c.l.b16 %v64
  %v248 = vunpack.c.h.b16 %v64
  %v249 = vunpack.c.l.b16 %v65
  %v250 = vunpack.c.h.b16 %v65
  %v251 = vunpack.c.l.b16 %v66
  %v252 = vunpack.c.h.b16 %v66
  %v253 = vunpack.c.l.b16 %v67
  %v254 = vunpack.c.h.b16 %v67
  %v255 = vunpack.c.l.b16 %v68
  %v256 = vunpack.c.h.b16 %v68
  %v257 = vunpack.c.l.b16 %v69
  %v258 = vunpack.c.h.b16 %v69
  %v259 = vunpack.c.l.b16 %v70
  %v260 = vunpack.c.h.b16 %v70
  %v261 = vunpack.c.l.b16 %v71
  %v262 = vunpack.c.h.b16 %v71
  %v263 = vunpack.c.l.b16 %v72
  %v264 = vunpack.c.h.b16 %v72
  %v265 = vunpack.c.l.b16 %v73
  %v266 = vunpack.c.h.b16 %v73
  %v267 = vunpack.c.l.b16 %v74
  %v268 = vunpack.c.h.b16 %v74
  %v269 = vunpack.c.l.b16 %v75
  %v270 = vunpack.c.h.b16 %v75
  %v271 = vunpack.c.l.b16 %v76
  %v272 = vunpack.c.h.b16 %v76
  %v273 = vunpack.c.l.b16 %v77
  %v274 = vunpack.c.h.b16 %v77
  %v275 = vunpack.c.l.b16 %v78
  %v276 = vunpack.c.h.b16 %v78
  %v277 = vunpack.c.l.b16 %v79
  %v278 = vunpack.c.h.b16 %v79
  %v279 = vunpack.c.l.b16 %v80
  %v280 = vunpack.c.h.b16 %v80
  %v281 = vunpack.c.l.b16 %v81
  %v282 = vunpack.c.h.b16 %v81
  %v283 = vunpack.c.l.b16 %v82
  %v284 = vunpack.c.h.b16 %v82
  %v285 = vunpack.c.l.b16 %v83
  %v286 = vunpack.c.h.b16 %v83
  %v287 = vunpack.c.l.b16 %v84
  %v288 = vunpack.c.h.b16 %v84
  %v289 = vunpack.c.l.b16 %v85
  %v290 = vunpack.c.h.b16 %v85
  %v291 = vunpack.c.l.b16 %v86
  %v292 = vunpack.c.h.b16 %v86
  %v293 = vunpack.c.l.b16 %v87
  %v294 = vunpack.c.h.b16 %v87
  %v295 = vunpack.c.l.b16 %v88
  %v296 = vunpack.c.h.b16 %v88
  %v297 = vunpack.c.l.b16 %v89
  %v298 = vunpack.c.h.b16 %v89
  %v299 = vunpack.c.l.b16 %v90
  %v300 = vunpack.c.h.b16 %v90
  %v301 = vunpack.c.l.b16 %v91
  %v302 = vunpack.c.h.b16 %v91
  %v303 = vunpack.c.l.b16 %v92
  %v304 = vunpack.c.h.b16 %v92
  %v305 = vpack.c.b16 %v181, %v177
  %v306 = vpack.c.b16 %v182, %v178
  %v307 = vpack.c.b16 %v183, %v179
  %v308 = vpack.c.b16 %v184, %v180
  %v309 = vpack.c.b16 %v189, %v185
  %v310 = vpack.c.b16 %v190, %v186
  %v311 = vpack.c.b16 %v191, %v187
  %v312 = vpack.c.b16 %v192, %v188
  %v313 = vpack.c.b16 %v197, %v193
  %v314 = vpack.c.b16 %v198, %v194
  %v315 = vpack.c.b16 %v199, %v195
  %v316 = vpack.c.b16 %v200, %v196
  %v317 = vpack.c.b16 %v205, %v201
  %v318 = vpack.c.b16 %v206, %v202
  %v319 = vpack.c.b16 %v207, %v203
  %v320 = vpack.c.b16 %v208, %v204
  %v321 = vpack.c.b16 %v213, %v209
  %v322 = vpack.c.b16 %v214, %v210
  %v323 = vpack.c.b16 %v215, %v211
  %v324 = vpack.c.b16 %v216, %v212
  %v325 = vpack.c.b16 %v221, %v217
  %v326 = vpack.c.b16 %v222, %v218
  %v327 = vpack.c.b16 %v223, %v219
  %v328 = vpack.c.b16 %v224, %v220
  %v329 = vpack.c.b16 %v229, %v225
  %v330 = vpack.c.b16 %v230, %v226
  %v331 = vpack.c.b16 %v231, %v227
  %v332 = vpack.c.b16 %v232, %v228
  %v333 = vpack.c.b16 %v237, %v233
  %v334 = vpack.c.b16 %v238, %v234
  %v335 = vpack.c.b16 %v239, %v235
  %v336 = vpack.c.b16 %v240, %v236
  %v337 = vpack.c.b16 %v245, %v241
  %v338 = vpack.c.b16 %v246, %v242
  %v339 = vpack.c.b16 %v247, %v243
  %v340 = vpack.c.b16 %v248, %v244
  %v341 = vpack.c.b16 %v253, %v249
  %v342 = vpack.c.b16 %v254, %v250
  %v343 = vpack.c.b16 %v255, %v251
  %v344 = vpack.c.b16 %v256, %v252
  %v345 = vpack.c.b16 %v261, %v257
  %v346 = vpack.c.b16 %v262, %v258
  %v347 = vpack.c.b16 %v263, %v259
  %v348 = vpack.c.b16 %v264, %v260
  %v349 = vpack.c.b16 %v269, %v265
  %v350 = vpack.c.b16 %v270, %v266
  %v351 = vpack.c.b16 %v271, %v267
  %v352 = vpack.c.b16 %v272, %v268
  %v353 = vpack.c.b16 %v277, %v273
  %v354 = vpack.c.b16 %v278, %v274
  %v355 = vpack.c.b16 %v279, %v275
  %v356 = vpack.c.b16 %v280, %v276
  %v357 = vpack.c.b16 %v285, %v281
  %v358 = vpack.c.b16 %v286, %v282
  %v359 = vpack.c.b16 %v287, %v283
  %v360 = vpack.c.b16 %v288, %v284
  %v361 = vpack.c.b16 %v293, %v289
  %v362 = vpack.c.b16 %v294, %v290
  %v363 = vpack.c.b16 %v295, %v291
  %v364 = vpack.c.b16 %v296, %v292
  %v365 = vpack.c.b16 %v301, %v297
  %v366 = vpack.c.b16 %v302, %v298
  %v367 = vpack.c.b16 %v303, %v299
  %v368 = vpack.c.b16 %v304, %v300
  %433 = vmatpush.bf16.msra.mxu0 %v333
  %434 = vmatpush.bf16.msra.mxu0 %v329
  %435 = vmatpush.bf16.msra.mxu0 %v325
  %436 = vmatpush.bf16.msra.mxu0 %v321
  %437 = vmatpush.bf16.msra.mxu0 %v317
  %438 = vmatpush.bf16.msra.mxu0 %v313
  %439 = vmatpush.bf16.msra.mxu0 %v309
  %440 = vmatpush.bf16.msra.mxu0 %v305
  %441 = vmatmul.bf16.gmra.mxu0 %v109
  %v442 = vpop.f32.mrf.mxu0
  %v443 = vadd.f32 %v95, %v442
  %v444 = vpop.f32.mrf.mxu0
  %v445 = vadd.f32 %v95, %v444
  %446 = vdwg.mxu0
  %447 = vmatpush.bf16.msra.mxu0 %v365
  %448 = vmatpush.bf16.msra.mxu0 %v361
  %449 = vmatpush.bf16.msra.mxu0 %v357
  %450 = vmatpush.bf16.msra.mxu0 %v353
  %451 = vmatpush.bf16.msra.mxu0 %v349
  %452 = vmatpush.bf16.msra.mxu0 %v345
  %453 = vmatpush.bf16.msra.mxu0 %v341
  %454 = vmatpush.bf16.msra.mxu0 %v337
  %455 = vmatmul.bf16.gmra.mxu0 %v110
  %v456 = vpop.f32.mrf.mxu0
  %v457 = vadd.f32 %v443, %v456
  %v458 = vpop.f32.mrf.mxu0
  %v459 = vadd.f32 %v445, %v458
  %460 = vdwg.mxu0
  %461 = vmatpush.bf16.msra.mxu0 %v334
  %462 = vmatpush.bf16.msra.mxu0 %v330
  %463 = vmatpush.bf16.msra.mxu0 %v326
  %464 = vmatpush.bf16.msra.mxu0 %v322
  %465 = vmatpush.bf16.msra.mxu0 %v318
  %466 = vmatpush.bf16.msra.mxu0 %v314
  %467 = vmatpush.bf16.msra.mxu0 %v310
  %468 = vmatpush.bf16.msra.mxu0 %v306
  %469 = vmatmul.bf16.gmra.mxu0 %v109
  %v470 = vpop.f32.mrf.mxu0
  %v471 = vadd.f32 %v96, %v470
  %v472 = vpop.f32.mrf.mxu0
  %v473 = vadd.f32 %v96, %v472
  %474 = vdwg.mxu0
  %475 = vmatpush.bf16.msra.mxu0 %v366
  %476 = vmatpush.bf16.msra.mxu0 %v362
  %477 = vmatpush.bf16.msra.mxu0 %v358
  %478 = vmatpush.bf16.msra.mxu0 %v354
  %479 = vmatpush.bf16.msra.mxu0 %v350
  %480 = vmatpush.bf16.msra.mxu0 %v346
  %481 = vmatpush.bf16.msra.mxu0 %v342
  %482 = vmatpush.bf16.msra.mxu0 %v338
  %483 = vmatmul.bf16.gmra.mxu0 %v110
  %v484 = vpop.f32.mrf.mxu0
  %v485 = vadd.f32 %v471, %v484
  %v486 = vpop.f32.mrf.mxu0
  %v487 = vadd.f32 %v473, %v486
  %488 = vdwg.mxu0
  %489 = vmatpush.bf16.msra.mxu0 %v335
  %490 = vmatpush.bf16.msra.mxu0 %v331
  %491 = vmatpush.bf16.msra.mxu0 %v327
  %492 = vmatpush.bf16.msra.mxu0 %v323
  %493 = vmatpush.bf16.msra.mxu0 %v319
  %494 = vmatpush.bf16.msra.mxu0 %v315
  %495 = vmatpush.bf16.msra.mxu0 %v311
  %496 = vmatpush.bf16.msra.mxu0 %v307
  %497 = vmatmul.bf16.gmra.mxu0 %v109
  %v498 = vpop.f32.mrf.mxu0
  %v499 = vadd.f32 %v97, %v498
  %v500 = vpop.f32.mrf.mxu0
  %v501 = vadd.f32 %v97, %v500
  %502 = vdwg.mxu0
  %503 = vmatpush.bf16.msra.mxu0 %v367
  %504 = vmatpush.bf16.msra.mxu0 %v363
  %505 = vmatpush.bf16.msra.mxu0 %v359
  %506 = vmatpush.bf16.msra.mxu0 %v355
  %507 = vmatpush.bf16.msra.mxu0 %v351
  %508 = vmatpush.bf16.msra.mxu0 %v347
  %509 = vmatpush.bf16.msra.mxu0 %v343
  %510 = vmatpush.bf16.msra.mxu0 %v339
  %511 = vmatmul.bf16.gmra.mxu0 %v110
  %v512 = vpop.f32.mrf.mxu0
  %v513 = vadd.f32 %v499, %v512
  %v514 = vpop.f32.mrf.mxu0
  %v515 = vadd.f32 %v501, %v514
  %516 = vdwg.mxu0
  %517 = vmatpush.bf16.msra.mxu0 %v336
  %518 = vmatpush.bf16.msra.mxu0 %v332
  %519 = vmatpush.bf16.msra.mxu0 %v328
  %520 = vmatpush.bf16.msra.mxu0 %v324
  %521 = vmatpush.bf16.msra.mxu0 %v320
  %522 = vmatpush.bf16.msra.mxu0 %v316
  %523 = vmatpush.bf16.msra.mxu0 %v312
  %524 = vmatpush.bf16.msra.mxu0 %v308
  %525 = vmatmul.bf16.gmra.mxu0 %v109
  %v526 = vpop.f32.mrf.mxu0
  %v527 = vadd.f32 %v98, %v526
  %v528 = vpop.f32.mrf.mxu0
  %v529 = vadd.f32 %v98, %v528
  %530 = vdwg.mxu0
  %531 = vmatpush.bf16.msra.mxu0 %v368
  %532 = vmatpush.bf16.msra.mxu0 %v364
  %533 = vmatpush.bf16.msra.mxu0 %v360
  %534 = vmatpush.bf16.msra.mxu0 %v356
  %535 = vmatpush.bf16.msra.mxu0 %v352
  %536 = vmatpush.bf16.msra.mxu0 %v348
  %537 = vmatpush.bf16.msra.mxu0 %v344
  %538 = vmatpush.bf16.msra.mxu0 %v340
  %539 = vmatmul.bf16.gmra.mxu0 %v110
  %v540 = vpop.f32.mrf.mxu0
  %v541 = vadd.f32 %v527, %v540
  %v542 = vpop.f32.mrf.mxu0
  %v543 = vadd.f32 %v529, %v542
  %544 = vdwg.mxu0
  %v545 = vmax.f32 %v457, 0.0
  %v546 = vmax.f32 %v485, 0.0
  %v547 = vmax.f32 %v513, 0.0
  %v548 = vmax.f32 %v541, 0.0
  %v549 = vmax.f32 %v459, 0.0
  %v550 = vmax.f32 %v487, 0.0
  %v551 = vmax.f32 %v515, 0.0
  %v552 = vmax.f32 %v543, 0.0
  %v553 = vpack.c.bf16 %v549, %v545
  %v554 = vpack.c.bf16 %v550, %v546
  %v555 = vpack.c.bf16 %v551, %v547
  %v556 = vpack.c.bf16 %v552, %v548
  %v557 = vld [vmem:[%s3] sm:$0xff]
  %v558 = vld [vmem:[%s3 + $0x8] sm:$0xff]
  %v559 = vld [vmem:[%s3 + $0x10] sm:$0xff]
  %v560 = vld [vmem:[%s3 + $0x18] sm:$0xff]
  %v561 = vld [vmem:[%s3 + $0x20] sm:$0xff]
  %v562 = vld [vmem:[%s3 + $0x28] sm:$0xff]
  %v563 = vld [vmem:[%s3 + $0x30] sm:$0xff]
  %v564 = vld [vmem:[%s3 + $0x38] sm:$0xff]
  %v565 = vld [vmem:[%s3 + $0x40] sm:$0xff]
  %v566 = vld [vmem:[%s3 + $0x48] sm:$0xff]
  %v567 = vld [vmem:[%s3 + $0x50] sm:$0xff]
  %v568 = vld [vmem:[%s3 + $0x58] sm:$0xff]
  %v569 = vld [vmem:[%s3 + $0x60] sm:$0xff]
  %v570 = vld [vmem:[%s3 + $0x68] sm:$0xff]
  %v571 = vld [vmem:[%s3 + $0x70] sm:$0xff]
  %v572 = vld [vmem:[%s3 + $0x78] sm:$0xff]
  %v573 = vld [vmem:[%s3 + $0x80] sm:$0xff]
  %v574 = vld [vmem:[%s3 + $0x88] sm:$0xff]
  %v575 = vld [vmem:[%s3 + $0x90] sm:$0xff]
  %v576 = vld [vmem:[%s3 + $0x98] sm:$0xff]
  %v577 = vld [vmem:[%s3 + $0xa0] sm:$0xff]
  %v578 = vld [vmem:[%s3 + $0xa8] sm:$0xff]
  %v579 = vld [vmem:[%s3 + $0xb0] sm:$0xff]
  %v580 = vld [vmem:[%s3 + $0xb8] sm:$0xff]
  %v581 = vld [vmem:[%s3 + $0xc0] sm:$0xff]
  %v582 = vld [vmem:[%s3 + $0xc8] sm:$0xff]
  %v583 = vld [vmem:[%s3 + $0xd0] sm:$0xff]
  %v584 = vld [vmem:[%s3 + $0xd8] sm:$0xff]
  %v585 = vld [vmem:[%s3 + $0xe0] sm:$0xff]
  %v586 = vld [vmem:[%s3 + $0xe8] sm:$0xff]
  %v587 = vld [vmem:[%s3 + $0xf0] sm:$0xff]
  %v588 = vld [vmem:[%s3 + $0xf8] sm:$0xff]
  %v589 = vld [vmem:[%s3 + $0x100] sm:$0xff]
  %v590 = vld [vmem:[%s3 + $0x108] sm:$0xff]
  %v591 = vld [vmem:[%s3 + $0x110] sm:$0xff]
  %v592 = vld [vmem:[%s3 + $0x118] sm:$0xff]
  %v593 = vld [vmem:[%s3 + $0x120] sm:$0xff]
  %v594 = vld [vmem:[%s3 + $0x128] sm:$0xff]
  %v595 = vld [vmem:[%s3 + $0x130] sm:$0xff]
  %v596 = vld [vmem:[%s3 + $0x138] sm:$0xff]
  %v597 = vld [vmem:[%s3 + $0x140] sm:$0xff]
  %v598 = vld [vmem:[%s3 + $0x148] sm:$0xff]
  %v599 = vld [vmem:[%s3 + $0x150] sm:$0xff]
  %v600 = vld [vmem:[%s3 + $0x158] sm:$0xff]
  %v601 = vld [vmem:[%s3 + $0x160] sm:$0xff]
  %v602 = vld [vmem:[%s3 + $0x168] sm:$0xff]
  %v603 = vld [vmem:[%s3 + $0x170] sm:$0xff]
  %v604 = vld [vmem:[%s3 + $0x178] sm:$0xff]
  %v605 = vld [vmem:[%s3 + $0x180] sm:$0xff]
  %v606 = vld [vmem:[%s3 + $0x188] sm:$0xff]
  %v607 = vld [vmem:[%s3 + $0x190] sm:$0xff]
  %v608 = vld [vmem:[%s3 + $0x198] sm:$0xff]
  %v609 = vld [vmem:[%s3 + $0x1a0] sm:$0xff]
  %v610 = vld [vmem:[%s3 + $0x1a8] sm:$0xff]
  %v611 = vld [vmem:[%s3 + $0x1b0] sm:$0xff]
  %v612 = vld [vmem:[%s3 + $0x1b8] sm:$0xff]
  %v613 = vld [vmem:[%s4] sm:$0x3]
  %v615 = vperm.slane %v613, 0
  %v616 = vperm.slane %v613, 1
  %v675 = vunpack.c.l.b16 %v557
  %v676 = vunpack.c.h.b16 %v557
  %v677 = vunpack.c.l.b16 %v558
  %v678 = vunpack.c.h.b16 %v558
  %v679 = vunpack.c.l.b16 %v559
  %v680 = vunpack.c.h.b16 %v559
  %v681 = vunpack.c.l.b16 %v560
  %v682 = vunpack.c.h.b16 %v560
  %v683 = vunpack.c.l.b16 %v561
  %v684 = vunpack.c.h.b16 %v561
  %v685 = vunpack.c.l.b16 %v562
  %v686 = vunpack.c.h.b16 %v562
  %v687 = vunpack.c.l.b16 %v563
  %v688 = vunpack.c.h.b16 %v563
  %v689 = vunpack.c.l.b16 %v564
  %v690 = vunpack.c.h.b16 %v564
  %v691 = vunpack.c.l.b16 %v565
  %v692 = vunpack.c.h.b16 %v565
  %v693 = vunpack.c.l.b16 %v566
  %v694 = vunpack.c.h.b16 %v566
  %v695 = vunpack.c.l.b16 %v567
  %v696 = vunpack.c.h.b16 %v567
  %v697 = vunpack.c.l.b16 %v568
  %v698 = vunpack.c.h.b16 %v568
  %v699 = vunpack.c.l.b16 %v569
  %v700 = vunpack.c.h.b16 %v569
  %v701 = vunpack.c.l.b16 %v570
  %v702 = vunpack.c.h.b16 %v570
  %v703 = vunpack.c.l.b16 %v571
  %v704 = vunpack.c.h.b16 %v571
  %v705 = vunpack.c.l.b16 %v572
  %v706 = vunpack.c.h.b16 %v572
  %v707 = vunpack.c.l.b16 %v573
  %v708 = vunpack.c.h.b16 %v573
  %v709 = vunpack.c.l.b16 %v574
  %v710 = vunpack.c.h.b16 %v574
  %v711 = vunpack.c.l.b16 %v575
  %v712 = vunpack.c.h.b16 %v575
  %v713 = vunpack.c.l.b16 %v576
  %v714 = vunpack.c.h.b16 %v576
  %v715 = vunpack.c.l.b16 %v577
  %v716 = vunpack.c.h.b16 %v577
  %v717 = vunpack.c.l.b16 %v578
  %v718 = vunpack.c.h.b16 %v578
  %v719 = vunpack.c.l.b16 %v579
  %v720 = vunpack.c.h.b16 %v579
  %v721 = vunpack.c.l.b16 %v580
  %v722 = vunpack.c.h.b16 %v580
  %v723 = vunpack.c.l.b16 %v581
  %v724 = vunpack.c.h.b16 %v581
  %v725 = vunpack.c.l.b16 %v582
  %v726 = vunpack.c.h.b16 %v582
  %v727 = vunpack.c.l.b16 %v583
  %v728 = vunpack.c.h.b16 %v583
  %v729 = vunpack.c.l.b16 %v584
  %v730 = vunpack.c.h.b16 %v584
  %v731 = vunpack.c.l.b16 %v585
  %v732 = vunpack.c.h.b16 %v585
  %v733 = vunpack.c.l.b16 %v586
  %v734 = vunpack.c.h.b16 %v586
  %v735 = vunpack.c.l.b16 %v587
  %v736 = vunpack.c.h.b16 %v587
  %v737 = vunpack.c.l.b16 %v588
  %v738 = vunpack.c.h.b16 %v588
  %v739 = vunpack.c.l.b16 %v589
  %v740 = vunpack.c.h.b16 %v589
  %v741 = vunpack.c.l.b16 %v590
  %v742 = vunpack.c.h.b16 %v590
  %v743 = vunpack.c.l.b16 %v591
  %v744 = vunpack.c.h.b16 %v591
  %v745 = vunpack.c.l.b16 %v592
  %v746 = vunpack.c.h.b16 %v592
  %v747 = vunpack.c.l.b16 %v593
  %v748 = vunpack.c.h.b16 %v593
  %v749 = vunpack.c.l.b16 %v594
  %v750 = vunpack.c.h.b16 %v594
  %v751 = vunpack.c.l.b16 %v595
  %v752 = vunpack.c.h.b16 %v595
  %v753 = vunpack.c.l.b16 %v596
  %v754 = vunpack.c.h.b16 %v596
  %v755 = vunpack.c.l.b16 %v597
  %v756 = vunpack.c.h.b16 %v597
  %v757 = vunpack.c.l.b16 %v598
  %v758 = vunpack.c.h.b16 %v598
  %v759 = vunpack.c.l.b16 %v599
  %v760 = vunpack.c.h.b16 %v599
  %v761 = vunpack.c.l.b16 %v600
  %v762 = vunpack.c.h.b16 %v600
  %v763 = vunpack.c.l.b16 %v601
  %v764 = vunpack.c.h.b16 %v601
  %v765 = vunpack.c.l.b16 %v602
  %v766 = vunpack.c.h.b16 %v602
  %v767 = vunpack.c.l.b16 %v603
  %v768 = vunpack.c.h.b16 %v603
  %v769 = vunpack.c.l.b16 %v604
  %v770 = vunpack.c.h.b16 %v604
  %v771 = vunpack.c.l.b16 %v605
  %v772 = vunpack.c.h.b16 %v605
  %v773 = vunpack.c.l.b16 %v606
  %v774 = vunpack.c.h.b16 %v606
  %v775 = vunpack.c.l.b16 %v607
  %v776 = vunpack.c.h.b16 %v607
  %v777 = vunpack.c.l.b16 %v608
  %v778 = vunpack.c.h.b16 %v608
  %v779 = vunpack.c.l.b16 %v609
  %v780 = vunpack.c.h.b16 %v609
  %v781 = vunpack.c.l.b16 %v610
  %v782 = vunpack.c.h.b16 %v610
  %v783 = vunpack.c.l.b16 %v611
  %v784 = vunpack.c.h.b16 %v611
  %v785 = vunpack.c.l.b16 %v612
  %v786 = vunpack.c.h.b16 %v612
  %v787 = vpack.c.b16 %v677, %v675
  %v788 = vpack.c.b16 %v678, %v676
  %v789 = vpack.c.b16 %v681, %v679
  %v790 = vpack.c.b16 %v682, %v680
  %v791 = vpack.c.b16 %v685, %v683
  %v792 = vpack.c.b16 %v686, %v684
  %v793 = vpack.c.b16 %v689, %v687
  %v794 = vpack.c.b16 %v690, %v688
  %v795 = vpack.c.b16 %v693, %v691
  %v796 = vpack.c.b16 %v694, %v692
  %v797 = vpack.c.b16 %v697, %v695
  %v798 = vpack.c.b16 %v698, %v696
  %v799 = vpack.c.b16 %v701, %v699
  %v800 = vpack.c.b16 %v702, %v700
  %v801 = vpack.c.b16 %v705, %v703
  %v802 = vpack.c.b16 %v706, %v704
  %v803 = vpack.c.b16 %v709, %v707
  %v804 = vpack.c.b16 %v710, %v708
  %v805 = vpack.c.b16 %v713, %v711
  %v806 = vpack.c.b16 %v714, %v712
  %v807 = vpack.c.b16 %v717, %v715
  %v808 = vpack.c.b16 %v718, %v716
  %v809 = vpack.c.b16 %v721, %v719
  %v810 = vpack.c.b16 %v722, %v720
  %v811 = vpack.c.b16 %v725, %v723
  %v812 = vpack.c.b16 %v726, %v724
  %v813 = vpack.c.b16 %v729, %v727
  %v814 = vpack.c.b16 %v730, %v728
  %v815 = vpack.c.b16 %v733, %v731
  %v816 = vpack.c.b16 %v734, %v732
  %v817 = vpack.c.b16 %v737, %v735
  %v818 = vpack.c.b16 %v738, %v736
  %v819 = vpack.c.b16 %v741, %v739
  %v820 = vpack.c.b16 %v742, %v740
  %v821 = vpack.c.b16 %v745, %v743
  %v822 = vpack.c.b16 %v746, %v744
  %v823 = vpack.c.b16 %v749, %v747
  %v824 = vpack.c.b16 %v750, %v748
  %v825 = vpack.c.b16 %v753, %v751
  %v826 = vpack.c.b16 %v754, %v752
  %v827 = vpack.c.b16 %v757, %v755
  %v828 = vpack.c.b16 %v758, %v756
  %v829 = vpack.c.b16 %v761, %v759
  %v830 = vpack.c.b16 %v762, %v760
  %v831 = vpack.c.b16 %v765, %v763
  %v832 = vpack.c.b16 %v766, %v764
  %v833 = vpack.c.b16 %v769, %v767
  %v834 = vpack.c.b16 %v770, %v768
  %v835 = vpack.c.b16 %v773, %v771
  %v836 = vpack.c.b16 %v774, %v772
  %v837 = vpack.c.b16 %v777, %v775
  %v838 = vpack.c.b16 %v778, %v776
  %v839 = vpack.c.b16 %v781, %v779
  %v840 = vpack.c.b16 %v782, %v780
  %v841 = vpack.c.b16 %v785, %v783
  %v842 = vpack.c.b16 %v786, %v784
  %vm899 = vcmask 523264
  %v901 = vsel %vm899, %v556, 0
  %903 = vmatpush.bf16.msra.mxu0 %v801
  %904 = vmatpush.bf16.msra.mxu0 %v799
  %905 = vmatpush.bf16.msra.mxu0 %v797
  %906 = vmatpush.bf16.msra.mxu0 %v795
  %907 = vmatpush.bf16.msra.mxu0 %v793
  %908 = vmatpush.bf16.msra.mxu0 %v791
  %909 = vmatpush.bf16.msra.mxu0 %v789
  %910 = vmatpush.bf16.msra.mxu0 %v787
  %911 = vmatmul.bf16.gmra.mxu0 %v553
  %v912 = vpop.f32.mrf.mxu0
  %v913 = vadd.f32 %v615, %v912
  %v914 = vpop.f32.mrf.mxu0
  %v915 = vadd.f32 %v615, %v914
  %916 = vdwg.mxu0
  %917 = vmatpush.bf16.msra.mxu0 %v817
  %918 = vmatpush.bf16.msra.mxu0 %v815
  %919 = vmatpush.bf16.msra.mxu0 %v813
  %920 = vmatpush.bf16.msra.mxu0 %v811
  %921 = vmatpush.bf16.msra.mxu0 %v809
  %922 = vmatpush.bf16.msra.mxu0 %v807
  %923 = vmatpush.bf16.msra.mxu0 %v805
  %924 = vmatpush.bf16.msra.mxu0 %v803
  %925 = vmatmul.bf16.gmra.mxu0 %v554
  %v926 = vpop.f32.mrf.mxu0
  %v927 = vadd.f32 %v913, %v926
  %v928 = vpop.f32.mrf.mxu0
  %v929 = vadd.f32 %v915, %v928
  %930 = vdwg.mxu0
  %931 = vmatpush.bf16.msra.mxu0 %v833
  %932 = vmatpush.bf16.msra.mxu0 %v831
  %933 = vmatpush.bf16.msra.mxu0 %v829
  %934 = vmatpush.bf16.msra.mxu0 %v827
  %935 = vmatpush.bf16.msra.mxu0 %v825
  %936 = vmatpush.bf16.msra.mxu0 %v823
  %937 = vmatpush.bf16.msra.mxu0 %v821
  %938 = vmatpush.bf16.msra.mxu0 %v819
  %939 = vmatmul.bf16.gmra.mxu0 %v555
  %v940 = vpop.f32.mrf.mxu0
  %v941 = vadd.f32 %v927, %v940
  %v942 = vpop.f32.mrf.mxu0
  %v943 = vadd.f32 %v929, %v942
  %944 = vdwg.mxu0
  %945 = vmatpush.bf16.msra.mxu0 0
  %946 = vmatpush.bf16.msra.mxu0 0
  %947 = vmatpush.bf16.msra.mxu0 0
  %948 = vmatpush.bf16.msra.mxu0 0
  %949 = vmatpush.bf16.msra.mxu0 %v841
  %950 = vmatpush.bf16.msra.mxu0 %v839
  %951 = vmatpush.bf16.msra.mxu0 %v837
  %952 = vmatpush.bf16.msra.mxu0 %v835
  %953 = vmatmul.bf16.gmra.mxu0 %v901
  %v954 = vpop.f32.mrf.mxu0
  %v955 = vadd.f32 %v941, %v954
  %v956 = vpop.f32.mrf.mxu0
  %v957 = vadd.f32 %v943, %v956
  %958 = vdwg.mxu0
  %959 = vmatpush.bf16.msra.mxu0 %v802
  %960 = vmatpush.bf16.msra.mxu0 %v800
  %961 = vmatpush.bf16.msra.mxu0 %v798
  %962 = vmatpush.bf16.msra.mxu0 %v796
  %963 = vmatpush.bf16.msra.mxu0 %v794
  %964 = vmatpush.bf16.msra.mxu0 %v792
  %965 = vmatpush.bf16.msra.mxu0 %v790
  %966 = vmatpush.bf16.msra.mxu0 %v788
  %967 = vmatmul.bf16.gmra.mxu0 %v553
  %v968 = vpop.f32.mrf.mxu0
  %v969 = vadd.f32 %v616, %v968
  %v970 = vpop.f32.mrf.mxu0
  %v971 = vadd.f32 %v616, %v970
  %972 = vdwg.mxu0
  %973 = vmatpush.bf16.msra.mxu0 %v818
  %974 = vmatpush.bf16.msra.mxu0 %v816
  %975 = vmatpush.bf16.msra.mxu0 %v814
  %976 = vmatpush.bf16.msra.mxu0 %v812
  %977 = vmatpush.bf16.msra.mxu0 %v810
  %978 = vmatpush.bf16.msra.mxu0 %v808
  %979 = vmatpush.bf16.msra.mxu0 %v806
  %980 = vmatpush.bf16.msra.mxu0 %v804
  %981 = vmatmul.bf16.gmra.mxu0 %v554
  %v982 = vpop.f32.mrf.mxu0
  %v983 = vadd.f32 %v969, %v982
  %v984 = vpop.f32.mrf.mxu0
  %v985 = vadd.f32 %v971, %v984
  %986 = vdwg.mxu0
  %987 = vmatpush.bf16.msra.mxu0 %v834
  %988 = vmatpush.bf16.msra.mxu0 %v832
  %989 = vmatpush.bf16.msra.mxu0 %v830
  %990 = vmatpush.bf16.msra.mxu0 %v828
  %991 = vmatpush.bf16.msra.mxu0 %v826
  %992 = vmatpush.bf16.msra.mxu0 %v824
  %993 = vmatpush.bf16.msra.mxu0 %v822
  %994 = vmatpush.bf16.msra.mxu0 %v820
  %995 = vmatmul.bf16.gmra.mxu0 %v555
  %v996 = vpop.f32.mrf.mxu0
  %v997 = vadd.f32 %v983, %v996
  %v998 = vpop.f32.mrf.mxu0
  %v999 = vadd.f32 %v985, %v998
  %1000 = vdwg.mxu0
  %1001 = vmatpush.bf16.msra.mxu0 0
  %1002 = vmatpush.bf16.msra.mxu0 0
  %1003 = vmatpush.bf16.msra.mxu0 0
  %1004 = vmatpush.bf16.msra.mxu0 0
  %1005 = vmatpush.bf16.msra.mxu0 %v842
  %1006 = vmatpush.bf16.msra.mxu0 %v840
  %1007 = vmatpush.bf16.msra.mxu0 %v838
  %1008 = vmatpush.bf16.msra.mxu0 %v836
  %1009 = vmatmul.bf16.gmra.mxu0 %v901
  %v1010 = vpop.f32.mrf.mxu0
  %v1011 = vadd.f32 %v997, %v1010
  %v1012 = vpop.f32.mrf.mxu0
  %v1013 = vadd.f32 %v999, %v1012
  %1014 = vdwg.mxu0
  %v1015 = vmax.f32 %v955, 0.0
  %v1016 = vmax.f32 %v1011, 0.0
  %v1017 = vmax.f32 %v957, 0.0
  %v1018 = vmax.f32 %v1013, 0.0
  %v1019 = vpack.c.bf16 %v1017, %v1015
  %v1020 = vpack.c.bf16 %v1018, %v1016
  %v1021 = vld [vmem:[%s5] sm:$0xf]
  %v1022 = vld [vmem:[%s5 + $0x4] sm:$0xf]
  %v1023 = vld [vmem:[%s5 + $0x8] sm:$0xf]
  %v1024 = vld [vmem:[%s5 + $0xc] sm:$0xf]
  %v1025 = vld [vmem:[%s5 + $0x10] sm:$0xf]
  %v1026 = vld [vmem:[%s5 + $0x14] sm:$0xf]
  %v1027 = vld [vmem:[%s5 + $0x18] sm:$0xf]
  %v1028 = vld [vmem:[%s5 + $0x1c] sm:$0xf]
  %v1029 = vld [vmem:[%s5 + $0x20] sm:$0xf]
  %v1030 = vld [vmem:[%s5 + $0x24] sm:$0xf]
  %v1031 = vld [vmem:[%s5 + $0x28] sm:$0xf]
  %v1032 = vld [vmem:[%s5 + $0x2c] sm:$0xf]
  %v1033 = vld [vmem:[%s5 + $0x30] sm:$0xf]
  %v1034 = vld [vmem:[%s5 + $0x34] sm:$0xf]
  %v1035 = vld [vmem:[%s5 + $0x38] sm:$0xf]
  %v1036 = vld [vmem:[%s5 + $0x3c] sm:$0xf]
  %v1037 = vld [vmem:[%s5 + $0x40] sm:$0xf]
  %v1038 = vld [vmem:[%s5 + $0x44] sm:$0xf]
  %v1039 = vld [vmem:[%s5 + $0x48] sm:$0xf]
  %v1040 = vld [vmem:[%s5 + $0x4c] sm:$0xf]
  %v1041 = vld [vmem:[%s5 + $0x50] sm:$0xf]
  %v1042 = vld [vmem:[%s5 + $0x54] sm:$0xf]
  %v1043 = vld [vmem:[%s5 + $0x58] sm:$0xf]
  %v1044 = vld [vmem:[%s5 + $0x5c] sm:$0xf]
  %v1045 = vld [vmem:[%s5 + $0x60] sm:$0xf]
  %v1046 = vld [vmem:[%s5 + $0x64] sm:$0xf]
  %v1047 = vld [vmem:[%s5 + $0x68] sm:$0xf]
  %v1048 = vld [vmem:[%s5 + $0x6c] sm:$0xf]
  %v1049 = vld [vmem:[%s6] sm:$0x1]
  %v1051 = vperm.slane %v1049, 0
  %v1081 = vunpack.c.l.b16 %v1021
  %v1082 = vunpack.c.l.b16 %v1022
  %v1083 = vunpack.c.l.b16 %v1023
  %v1084 = vunpack.c.l.b16 %v1024
  %v1085 = vunpack.c.l.b16 %v1025
  %v1086 = vunpack.c.l.b16 %v1026
  %v1087 = vunpack.c.l.b16 %v1027
  %v1088 = vunpack.c.l.b16 %v1028
  %v1089 = vunpack.c.l.b16 %v1029
  %v1090 = vunpack.c.l.b16 %v1030
  %v1091 = vunpack.c.l.b16 %v1031
  %v1092 = vunpack.c.l.b16 %v1032
  %v1093 = vunpack.c.l.b16 %v1033
  %v1094 = vunpack.c.l.b16 %v1034
  %v1095 = vunpack.c.l.b16 %v1035
  %v1096 = vunpack.c.l.b16 %v1036
  %v1097 = vunpack.c.l.b16 %v1037
  %v1098 = vunpack.c.l.b16 %v1038
  %v1099 = vunpack.c.l.b16 %v1039
  %v1100 = vunpack.c.l.b16 %v1040
  %v1101 = vunpack.c.l.b16 %v1041
  %v1102 = vunpack.c.l.b16 %v1042
  %v1103 = vunpack.c.l.b16 %v1043
  %v1104 = vunpack.c.l.b16 %v1044
  %v1105 = vunpack.c.l.b16 %v1045
  %v1106 = vunpack.c.l.b16 %v1046
  %v1107 = vunpack.c.l.b16 %v1047
  %v1108 = vunpack.c.l.b16 %v1048
  %v1109 = vpack.c.b16 %v1082, %v1081
  %v1110 = vpack.c.b16 %v1084, %v1083
  %v1111 = vpack.c.b16 %v1086, %v1085
  %v1112 = vpack.c.b16 %v1088, %v1087
  %v1113 = vpack.c.b16 %v1090, %v1089
  %v1114 = vpack.c.b16 %v1092, %v1091
  %v1115 = vpack.c.b16 %v1094, %v1093
  %v1116 = vpack.c.b16 %v1096, %v1095
  %v1117 = vpack.c.b16 %v1098, %v1097
  %v1118 = vpack.c.b16 %v1100, %v1099
  %v1119 = vpack.c.b16 %v1102, %v1101
  %v1120 = vpack.c.b16 %v1104, %v1103
  %v1121 = vpack.c.b16 %v1106, %v1105
  %v1122 = vpack.c.b16 %v1108, %v1107
  %vm1137 = vcmask 785408
  %v1139 = vsel %vm1137, %v1020, 0
  %1141 = vmatpush.bf16.msra.mxu0 %v1116
  %1142 = vmatpush.bf16.msra.mxu0 %v1115
  %1143 = vmatpush.bf16.msra.mxu0 %v1114
  %1144 = vmatpush.bf16.msra.mxu0 %v1113
  %1145 = vmatpush.bf16.msra.mxu0 %v1112
  %1146 = vmatpush.bf16.msra.mxu0 %v1111
  %1147 = vmatpush.bf16.msra.mxu0 %v1110
  %1148 = vmatpush.bf16.msra.mxu0 %v1109
  %1149 = vmatmul.bf16.gmra.mxu0 %v1019
  %v1150 = vpop.f32.mrf.mxu0
  %v1151 = vadd.f32 %v1051, %v1150
  %v1152 = vpop.f32.mrf.mxu0
  %v1153 = vadd.f32 %v1051, %v1152
  %1154 = vdwg.mxu0
  %1155 = vmatpush.bf16.msra.mxu0 0
  %1156 = vmatpush.bf16.msra.mxu0 0
  %1157 = vmatpush.bf16.msra.mxu0 %v1122
  %1158 = vmatpush.bf16.msra.mxu0 %v1121
  %1159 = vmatpush.bf16.msra.mxu0 %v1120
  %1160 = vmatpush.bf16.msra.mxu0 %v1119
  %1161 = vmatpush.bf16.msra.mxu0 %v1118
  %1162 = vmatpush.bf16.msra.mxu0 %v1117
  %1163 = vmatmul.bf16.gmra.mxu0 %v1139
  %v1164 = vpop.f32.mrf.mxu0
  %v1165 = vadd.f32 %v1151, %v1164
  %v1166 = vpop.f32.mrf.mxu0
  %v1167 = vadd.f32 %v1153, %v1166
  %1168 = vdwg.mxu0
  %1169 = vrot.lane.b32.xlu0 %v27, 32
  %v1170 = vpop.permute.xlu0 %1169
  %1171 = vrot.lane.b32.xlu0 %v28, 32
  %v1172 = vpop.permute.xlu0 %1171
  %v1173 = vrot.slane %v1170, 4
  %v1174 = vrot.slane %v1172, 4
  %v1177 = vunpack.c.l.bf16 %v1173
  %v1178 = vunpack.c.l.bf16 %v1174
  %vm1179 = vcmp.gt.f32.partialorder %v1177, 0.0
  %vm1180 = vcmp.gt.f32.partialorder %v1178, 0.0
  %v1181 = vsel %vm1179, %v1165, -inf
  %v1182 = vsel %vm1180, %v1167, -inf
  %vm1183 = vcmask 56320
  %v1184 = vsel %vm1183, %v1181, -inf
  %1185 = vmax.xlane.f32.xlu0 %v1184
  %v1186 = vpop.xlane.xlu0 %1185
  %v1187 = vsel %vm1183, %v1182, -inf
  %1188 = vmax.xlane.f32.xlu0 %v1187
  %v1189 = vpop.xlane.xlu0 %1188
  %v1190 = vsub.f32 %v1181, %v1186
  %v1191 = vsub.f32 %v1182, %v1189
  %v1192 = vmul.f32 %v1190, 1.442695
  %v1193 = vpow.pop %v1192
  %v1194 = vmul.f32 %v1191, 1.442695
  %v1195 = vpow.pop %v1194
  %v1196 = vsel %vm1183, %v1193, 0.0
  %1197 = vadd.xlane.f32.xlu0 %v1196
  %v1198 = vpop.xlane.xlu0 %1197
  %v1199 = vsel %vm1183, %v1195, 0.0
  %1200 = vadd.xlane.f32.xlu0 %v1199
  %v1201 = vpop.xlane.xlu0 %1200
  %v1202 = vrcp.pop %v1198
  %v1203 = vrcp.pop %v1201
  %v1204 = vmul.f32 %v1193, %v1202
  %v1205 = vmul.f32 %v1195, %v1203
  %1206 = vst.msk [vmem:[%s7] sm:$0xff] %vm1183, %v1204
  %1207 = vst.msk [vmem:[%s7 + $0x8] sm:$0xff] %vm1183, %v1205
  // Predicated region
  $region30: #{lstm_forward.1} parent=0 // pred_check
    _
  $region31: #{lstm_forward.1} parent=0 // pred_check_branch
    %1209 = sbr.rel (0) target = $region33
  $region32: #{lstm_forward.1} parent=0 // pred_region
    _
  $region33: #{lstm_forward.1} parent=0 // pred_fallthru
    _
  // Predicated region
  $region34: #{lstm_forward.1} parent=0 // pred_check
    _
  $region35: #{lstm_forward.1} parent=0 // pred_check_branch
    %1211 = sbr.rel (0) target = $region37
  $region36: #{lstm_forward.1} parent=0 // pred_region
    _
  $region37: #{lstm_forward.1} parent=0 // pred_fallthru
    _

</llo_original>
